<compile_context>
chip_gen: v6e
topology: v6e:2x2x1
jax: 0.10.0
libtpu: 0.0.40
codegen_flags: <defaults>
</compile_context>

<pallas_src>
import functools

import jax
import jax.numpy as jnp
from jax.experimental import pallas as pl
from jax.experimental.pallas import tpu as pltpu

# ----------------------------- configuration ------------------------------
B = 2          # batch
S = 8          # sequence length
H = 32         # hidden size
V = 64         # vocab size
M = 8          # number of masked positions
PAD_ID = 0     # model.pad_id()

LANE = 128     # TPU lane width; last dims padded to a multiple of this
_NEG = -1e30   # bias for padded vocab columns (exactly 0 after exp)


def _round_up(x, m):
    return (x + m - 1) // m * m


# ---------------- fused vocab projection + cross-entropy kernel -------------
def _ce_kernel(h_ref, wo_ref, bo_ref, tgt_ref,
               loss_ref, valid_ref,
               m_scr, l_scr, t_scr,
               *, v_tile, pad_id):
    """Grid = (m_tiles, v_tiles); the vocab axis is the streamed reduction axis.

    Per m-tile:
      vi == 0 : online-logsumexp accumulators reset.
      each vi : logits tile = hidden @ wo[:, vi*v_tile:...] + bo  (VMEM only),
                online logsumexp update + target-logit extraction.
      last vi : per-row CE and ignore_index mask written out (rule-compliant
                (m_tile, 1) blocks); final reduction happens in JAX.
    """
    vi = pl.program_id(1)

    @pl.when(vi == 0)
    def _init():
        m_scr[...] = jnp.full_like(m_scr, -jnp.inf)
        l_scr[...] = jnp.zeros_like(l_scr)
        t_scr[...] = jnp.zeros_like(t_scr)

    # bf16 x bf16 on the MXU, f32 accumulation; everything after the dot is f32.
    # The (m_tile, v_tile) logits tile never leaves VMEM/vregs.
    logits = jnp.dot(h_ref[...], wo_ref[...],
                     preferred_element_type=jnp.float32) + bo_ref[...]

    # Online logsumexp over streamed vocab tiles (all f32).
    m_new = jnp.maximum(m_scr[...], jnp.max(logits, axis=-1, keepdims=True))
    alpha = jnp.exp(m_scr[...] - m_new)
    l_scr[...] = alpha * l_scr[...] + jnp.sum(jnp.exp(logits - m_new),
                                              axis=-1, keepdims=True)
    m_scr[...] = m_new

    # Target logit for this vocab tile: tile-local iota + shifted target (real
    # targets never hit padded columns since target < V).
    local_tgt = tgt_ref[...] - vi * v_tile                           # (tm, 1)
    vocab_ids = jax.lax.broadcasted_iota(jnp.int32, logits.shape, 1)
    t_scr[...] += jnp.sum(jnp.where(vocab_ids == local_tgt, logits, 0.0),
                          axis=-1, keepdims=True)

    @pl.when(vi == pl.num_programs(1) - 1)
    def _finalize():
        lse = m_scr[...] + jnp.log(l_scr[...])
        valid = (tgt_ref[...] != pad_id).astype(jnp.float32)
        loss_ref[...] = (lse - t_scr[...]) * valid
        valid_ref[...] = valid


def fused_vocab_ce(hidden, wo, bo, target, *, pad_id):
    """hidden: (M, H) masked-row activations -> per-row (loss, valid) arrays."""
    m_rows, h_dim = hidden.shape
    v_dim = wo.shape[1]

    hp = _round_up(h_dim, LANE)
    vp = _round_up(v_dim, LANE)

    # Every m-tile re-streams the whole wo matrix from HBM, so make m_tile as
    # large as a v7x-sized VMEM budget allows (64 MiB/TC).  Cap 1024 keeps the
    # bf16 working set ~13 MiB at H=1024.
    m_tile = min(1024, _round_up(m_rows, 8))
    mp = _round_up(m_rows, m_tile)
    n_mt = mp // m_tile
    # TODO(synk): on v7x keep n_mt >= 2 (two TensorCores) when m_rows is large;
    # with m_tile=1024 that holds for any realistic masked-token count.

    # v_tile: lane-dense, multiple of 256 when possible (v6e/v7x MXU); 1024
    # amortizes the ~0.35 us per-grid-step overhead over a big wo DMA/MXU burst.
    v_tile = min(vp, 8 * LANE)
    n_vt = vp // v_tile
    # No vocab tile may consist purely of padded (-1e30) columns, or the online
    # logsumexp arithmetic degrades.
    assert vp - v_dim < v_tile, (vp, v_dim, v_tile)

    # Lane-dense padding.  Matmul operands in bf16; biases stay f32 and padded
    # vocab columns get a -1e30 bias so exp() is exactly 0; padded rows get
    # target=pad_id so ignore_index drops them.
    h_p = jnp.zeros((mp, hp), jnp.bfloat16).at[:m_rows, :h_dim].set(
        hidden.astype(jnp.bfloat16))
    wo_p = jnp.zeros((hp, vp), jnp.bfloat16).at[:h_dim, :v_dim].set(
        wo.astype(jnp.bfloat16))
    bo_p = jnp.full((1, vp), _NEG, jnp.float32).at[:, :v_dim].set(bo)
    tgt_p = jnp.full((mp, 1), pad_id, jnp.int32).at[:m_rows, 0].set(
        target.astype(jnp.int32))

    # VMEM budget: double-buffered hidden/wo/bo/tgt/output blocks, f32 logits
    # intermediate, scratch accumulators.  Explicit limit so the bigger tiles
    # are honoured on v5e (16 MiB scoped default) and leave headroom on v7x.
    vmem_bytes = (2 * m_tile * hp * 2          # hidden (bf16, double-buffered)
                  + 2 * hp * v_tile * 2        # wo tile (bf16, double-buffered)
                  + 2 * v_tile * 4             # bo tile
                  + 2 * m_tile * 4             # targets
                  + 2 * 2 * m_tile * 4         # two per-row outputs
                  + m_tile * v_tile * 4        # f32 logits intermediate
                  + 3 * m_tile * 4)            # scratch accumulators
    vmem_limit = int(min(64 * 2**20, max(32 * 2**20, 2 * vmem_bytes)))

    cost = pl.CostEstimate(
        flops=2 * mp * hp * vp,
        transcendentals=mp * vp,
        bytes_accessed=(n_mt * hp * vp * 2     # wo re-streamed once per m-tile
                        + mp * hp * 2          # hidden (bf16)
                        + n_mt * vp * 4        # bo per m-tile
                        + mp * 4               # targets
                        + 2 * mp * 4),         # per-row outputs
    )

    kernel = functools.partial(_ce_kernel, v_tile=v_tile, pad_id=pad_id)
    loss_rows, valid_rows = pl.pallas_call(
        kernel,
        out_shape=(jax.ShapeDtypeStruct((mp, 1), jnp.float32),
                   jax.ShapeDtypeStruct((mp, 1), jnp.float32)),
        grid_spec=pltpu.PrefetchScalarGridSpec(
            num_scalar_prefetch=0,
            grid=(n_mt, n_vt),
            in_specs=[
                pl.BlockSpec((m_tile, hp), lambda mi, vi: (mi, 0)),   # hidden tile
                pl.BlockSpec((hp, v_tile), lambda mi, vi: (0, vi)),   # wo vocab tile
                pl.BlockSpec((1, v_tile), lambda mi, vi: (0, vi)),    # bo vocab tile
                pl.BlockSpec((m_tile, 1), lambda mi, vi: (mi, 0)),    # targets
            ],
            out_specs=[
                pl.BlockSpec((m_tile, 1), lambda mi, vi: (mi, 0)),    # per-row loss
                pl.BlockSpec((m_tile, 1), lambda mi, vi: (mi, 0)),    # per-row valid
            ],
            scratch_shapes=[
                pltpu.VMEM((m_tile, 1), jnp.float32),   # running max
                pltpu.VMEM((m_tile, 1), jnp.float32),   # running sum(exp)
                pltpu.VMEM((m_tile, 1), jnp.float32),   # target logit
            ],
        ),
        compiler_params=pltpu.CompilerParams(
            dimension_semantics=("parallel", "arbitrary"),
            vmem_limit_bytes=vmem_limit),
        cost_estimate=cost,
    )(h_p, wo_p, bo_p, tgt_p)
    return loss_rows, valid_rows


# ------------------------------ BertLoss fwd -------------------------------
def _predict_hidden(params, tokens):
    """Synthetic per-token predictor trunk: embed -> Linear(H,H) + GELU.
    Mixed precision: bf16 matmul operands, f32 accumulation / activation."""
    emb, w1, b1, _, _ = params
    x = jnp.take(emb, tokens, axis=0)
    h = jnp.dot(x.astype(jnp.bfloat16), w1.astype(jnp.bfloat16),
                preferred_element_type=jnp.float32) + b1
    # TODO(synk): PyTorch F.gelu defaults to exact erf; tanh-approx kept here to
    # match the synthetic predictor definition on both kernel and reference path.
    return jax.nn.gelu(h, approximate=True)


def bert_loss(params, masked_encoder_in, masked_idx, target):
    _, _, _, wo, bo = params
    # Gather masked rows BEFORE the head: only the M masked rows go through the
    # hidden + vocab projections and the full (B*S, V) logits never exist.
    tok = masked_encoder_in.reshape(-1)[masked_idx]                  # (M,)
    # Hidden projection hoisted out of the CE kernel (perf review): it is a tiny
    # (M,H)x(H,H) op next to the wo streaming, and removing the constant w1
    # block frees CE-kernel VMEM for larger m/v tiles.
    hidden = _predict_hidden(params, tok)                            # (M, H) f32
    loss_rows, valid_rows = fused_vocab_ce(hidden, wo, bo, target, pad_id=PAD_ID)
    total = jnp.sum(loss_rows)
    n = jnp.sum(valid_rows)
    loss = jnp.where(n > 0, total / n, 0.0)      # guard: all targets ignored
    return {"loss": loss}


# ---------------------------- pure-JAX reference ---------------------------
def bert_loss_ref(params, masked_encoder_in, masked_idx, target):
    emb, w1, b1, wo, bo = params
    x = jnp.take(emb, masked_encoder_in.reshape(-1), axis=0)
    h = jnp.dot(x.astype(jnp.bfloat16), w1.astype(jnp.bfloat16),
                preferred_element_type=jnp.float32) + b1
    h = jax.nn.gelu(h, approximate=True)
    pred = jnp.dot(h.astype(jnp.bfloat16), wo.astype(jnp.bfloat16),
                   preferred_element_type=jnp.float32) + bo
    out = pred[masked_idx]
    lse = jax.scipy.special.logsumexp(out, axis=-1)
    tgt_logit = jnp.take_along_axis(out, target[:, None], axis=-1)[:, 0]
    valid = (target != PAD_ID).astype(jnp.float32)
    return jnp.sum((lse - tgt_logit) * valid) / jnp.sum(valid)


if __name__ == "__main__":
    key = jax.random.PRNGKey(0)
    k_emb, k_w1, k_b1, k_wo, k_bo, k_tok, k_idx, k_tgt = jax.random.split(key, 8)

    # Deterministic synthetic parameters.
    emb = jax.random.normal(k_emb, (V, H), jnp.float32) * 0.02
    w1 = jax.random.normal(k_w1, (H, H), jnp.float32) * 0.02
    b1 = jax.random.normal(k_b1, (1, H), jnp.float32) * 0.02
    wo = jax.random.normal(k_wo, (H, V), jnp.float32) * 0.02
    bo = jax.random.normal(k_bo, (1, V), jnp.float32) * 0.02
    params = (emb, w1, b1, wo, bo)

    # Deterministic sample (BertSample).
    masked_encoder_in = jax.random.randint(k_tok, (B, S), 0, V, jnp.int32)
    masked_idx = jax.random.permutation(k_idx, B * S)[:M].astype(jnp.int32)
    target = jax.random.randint(k_tgt, (M,), 2, V, jnp.int32)
    target = target.at[3].set(PAD_ID)  # exercise ignore_index

    result = jax.jit(bert_loss)(params, masked_encoder_in, masked_idx, target)
    loss = jax.block_until_ready(result["loss"])

    ref = bert_loss_ref(params, masked_encoder_in, masked_idx, target)
    assert jnp.allclose(loss, ref, rtol=1e-4, atol=1e-4), (loss, ref)
    print("KERNEL_OK")
</pallas_src>

<mosaic_0001>
module attributes {stable_mosaic.version = 11 : i64} {
  func.func @_ce_kernel(%arg0: i32, %arg1: i32, %arg2: memref<8x128xbf16, #tpu.memory_space<vmem>>, %arg3: memref<128x128xbf16, #tpu.memory_space<vmem>>, %arg4: memref<1x128xf32, #tpu.memory_space<vmem>>, %arg5: memref<8x1xi32, #tpu.memory_space<vmem>>, %arg6: memref<8x1xf32, #tpu.memory_space<vmem>>, %arg7: memref<8x1xf32, #tpu.memory_space<vmem>>, %arg8: memref<8x1xf32, #tpu.memory_space<vmem>>, %arg9: memref<8x1xf32, #tpu.memory_space<vmem>>, %arg10: memref<8x1xf32, #tpu.memory_space<vmem>>) attributes {dimension_semantics = [#tpu.dimension_semantics<parallel>, #tpu.dimension_semantics<arbitrary>], iteration_bounds = array<i64: 1, 1>, scalar_prefetch = 0 : i64, scratch_operands = 3 : i64, tpu.core_type = #tpu.core_type<tc>, window_params = [{transform_indices = @transform_0, window_bounds = array<i64: 8, 128>}, {transform_indices = @transform_1, window_bounds = array<i64: 128, 128>}, {transform_indices = @transform_2, window_bounds = array<i64: 1, 128>}, {transform_indices = @transform_3, window_bounds = array<i64: 8, 1>}, {transform_indices = @transform_4, window_bounds = array<i64: 8, 1>}, {transform_indices = @transform_5, window_bounds = array<i64: 8, 1>}]} {
    %c0_i32 = arith.constant 0 : i32
    %0 = arith.cmpi eq, %arg1, %c0_i32 : i32
    %1 = arith.extui %0 : i1 to i32
    %c0_i32_0 = arith.constant 0 : i32
    %2 = arith.cmpi ne, %1, %c0_i32_0 : i32
    scf.if %2 {
      %cst_28 = arith.constant 0xFF800000 : f32
      %43 = vector.broadcast %cst_28 : f32 to vector<8x1xf32>
      %c0_29 = arith.constant 0 : index
      %c0_30 = arith.constant 0 : index
      %44 = vector.load %arg8[%c0_29, %c0_30] : memref<8x1xf32, #tpu.memory_space<vmem>>, vector<8x1xf32>
      tpu.vector_store %arg8[%c0_29, %c0_30], %43 {strides = array<i32>} : memref<8x1xf32, #tpu.memory_space<vmem>>, vector<8x1xf32>,
      %cst_31 = arith.constant 0.000000e+00 : f32
      %45 = vector.broadcast %cst_31 : f32 to vector<8x1xf32>
      %c0_32 = arith.constant 0 : index
      %c0_33 = arith.constant 0 : index
      %46 = vector.load %arg9[%c0_32, %c0_33] : memref<8x1xf32, #tpu.memory_space<vmem>>, vector<8x1xf32>
      tpu.vector_store %arg9[%c0_32, %c0_33], %45 {strides = array<i32>} : memref<8x1xf32, #tpu.memory_space<vmem>>, vector<8x1xf32>,
      %cst_34 = arith.constant 0.000000e+00 : f32
      %47 = vector.broadcast %cst_34 : f32 to vector<8x1xf32>
      %c0_35 = arith.constant 0 : index
      %c0_36 = arith.constant 0 : index
      %48 = vector.load %arg10[%c0_35, %c0_36] : memref<8x1xf32, #tpu.memory_space<vmem>>, vector<8x1xf32>
      tpu.vector_store %arg10[%c0_35, %c0_36], %47 {strides = array<i32>} : memref<8x1xf32, #tpu.memory_space<vmem>>, vector<8x1xf32>,
    } else {
    }
    %c0 = arith.constant 0 : index
    %c0_1 = arith.constant 0 : index
    %3 = vector.load %arg2[%c0, %c0_1] : memref<8x128xbf16, #tpu.memory_space<vmem>>, vector<8x128xbf16>
    %c0_2 = arith.constant 0 : index
    %c0_3 = arith.constant 0 : index
    %4 = vector.load %arg3[%c0_2, %c0_3] : memref<128x128xbf16, #tpu.memory_space<vmem>>, vector<128x128xbf16>
    %cst = arith.constant dense<0.000000e+00> : vector<8x128xf32>
    %5 = tpu.matmul %3, %4, %cst {dimension_numbers = #tpu.dot_dimension_numbers<[1], [0], [0], [1], [0, 0, 1, 1], [], []>} : vector<8x128xbf16>, vector<128x128xbf16>, vector<8x128xf32> -> vector<8x128xf32>
    %c0_4 = arith.constant 0 : index
    %c0_5 = arith.constant 0 : index
    %6 = vector.load %arg4[%c0_4, %c0_5] : memref<1x128xf32, #tpu.memory_space<vmem>>, vector<1x128xf32>
    %7 = vector.broadcast %6 : vector<1x128xf32> to vector<8x128xf32>
    %8 = arith.addf %5, %7 : vector<8x128xf32>
    %c0_6 = arith.constant 0 : index
    %c0_7 = arith.constant 0 : index
    %9 = vector.load %arg8[%c0_6, %c0_7] : memref<8x1xf32, #tpu.memory_space<vmem>>, vector<8x1xf32>
    %cst_8 = arith.constant dense<0xFF800000> : vector<8xf32>
    %10 = vector.multi_reduction <maximumf>, %8, %cst_8 [1] : vector<8x128xf32> to vector<8xf32>
    %11 = vector.shape_cast %10 : vector<8xf32> to vector<8x1xf32>
    %12 = arith.maximumf %9, %11 : vector<8x1xf32>
    %c0_9 = arith.constant 0 : index
    %c0_10 = arith.constant 0 : index
    %13 = vector.load %arg8[%c0_9, %c0_10] : memref<8x1xf32, #tpu.memory_space<vmem>>, vector<8x1xf32>
    %14 = arith.subf %13, %12 : vector<8x1xf32>
    %15 = math.exp %14 : vector<8x1xf32>
    %c0_11 = arith.constant 0 : index
    %c0_12 = arith.constant 0 : index
    %16 = vector.load %arg9[%c0_11, %c0_12] : memref<8x1xf32, #tpu.memory_space<vmem>>, vector<8x1xf32>
    %17 = arith.mulf %15, %16 : vector<8x1xf32>
    %18 = vector.broadcast %12 : vector<8x1xf32> to vector<8x128xf32>
    %19 = arith.subf %8, %18 : vector<8x128xf32>
    %20 = math.exp %19 : vector<8x128xf32>
    %cst_13 = arith.constant dense<0.000000e+00> : vector<8xf32>
    %21 = vector.multi_reduction <add>, %20, %cst_13 [1] : vector<8x128xf32> to vector<8xf32>
    %22 = vector.shape_cast %21 : vector<8xf32> to vector<8x1xf32>
    %23 = arith.addf %17, %22 : vector<8x1xf32>
    %c0_14 = arith.constant 0 : index
    %c0_15 = arith.constant 0 : index
    %24 = vector.load %arg9[%c0_14, %c0_15] : memref<8x1xf32, #tpu.memory_space<vmem>>, vector<8x1xf32>
    tpu.vector_store %arg9[%c0_14, %c0_15], %23 {strides = array<i32>} : memref<8x1xf32, #tpu.memory_space<vmem>>, vector<8x1xf32>,
    %c0_16 = arith.constant 0 : index
    %c0_17 = arith.constant 0 : index
    %25 = vector.load %arg8[%c0_16, %c0_17] : memref<8x1xf32, #tpu.memory_space<vmem>>, vector<8x1xf32>
    tpu.vector_store %arg8[%c0_16, %c0_17], %12 {strides = array<i32>} : memref<8x1xf32, #tpu.memory_space<vmem>>, vector<8x1xf32>,
    %c0_18 = arith.constant 0 : index
    %c0_19 = arith.constant 0 : index
    %26 = vector.load %arg5[%c0_18, %c0_19] : memref<8x1xi32, #tpu.memory_space<vmem>>, vector<8x1xi32>
    %c128_i32 = arith.constant 128 : i32
    %27 = arith.muli %arg1, %c128_i32 : i32
    %28 = vector.broadcast %27 : i32 to vector<8x1xi32>
    %29 = arith.subi %26, %28 : vector<8x1xi32>
    %30 = tpu.iota {dimensions = array<i32: 1>} : vector<8x128xi32>
    %c0_20 = arith.constant 0 : index
    %c0_21 = arith.constant 0 : index
    %31 = vector.load %arg10[%c0_20, %c0_21] : memref<8x1xf32, #tpu.memory_space<vmem>>, vector<8x1xf32>
    %32 = vector.broadcast %29 : vector<8x1xi32> to vector<8x128xi32>
    %33 = arith.cmpi eq, %30, %32 : vector<8x128xi32>
    %cst_22 = arith.constant 0.000000e+00 : f32
    %34 = vector.broadcast %cst_22 : f32 to vector<8x128xf32>
    %35 = arith.select %33, %8, %34 : vector<8x128xi1>, vector<8x128xf32>
    %cst_23 = arith.constant dense<0.000000e+00> : vector<8xf32>
    %36 = vector.multi_reduction <add>, %35, %cst_23 [1] : vector<8x128xf32> to vector<8xf32>
    %37 = vector.shape_cast %36 : vector<8xf32> to vector<8x1xf32>
    %38 = arith.addf %31, %37 : vector<8x1xf32>
    %c0_24 = arith.constant 0 : index
    %c0_25 = arith.constant 0 : index
    %39 = vector.load %arg10[%c0_24, %c0_25] : memref<8x1xf32, #tpu.memory_space<vmem>>, vector<8x1xf32>
    tpu.vector_store %arg10[%c0_24, %c0_25], %38 {strides = array<i32>} : memref<8x1xf32, #tpu.memory_space<vmem>>, vector<8x1xf32>,
    %c0_i32_26 = arith.constant 0 : i32
    %40 = arith.cmpi eq, %arg1, %c0_i32_26 : i32
    %41 = arith.extui %40 : i1 to i32
    %c0_i32_27 = arith.constant 0 : i32
    %42 = arith.cmpi ne, %41, %c0_i32_27 : i32
    scf.if %42 {
      %c0_28 = arith.constant 0 : index
      %c0_29 = arith.constant 0 : index
      %43 = vector.load %arg8[%c0_28, %c0_29] : memref<8x1xf32, #tpu.memory_space<vmem>>, vector<8x1xf32>
      %c0_30 = arith.constant 0 : index
      %c0_31 = arith.constant 0 : index
      %44 = vector.load %arg9[%c0_30, %c0_31] : memref<8x1xf32, #tpu.memory_space<vmem>>, vector<8x1xf32>
      %45 = math.log %44 : vector<8x1xf32>
      %46 = arith.addf %43, %45 : vector<8x1xf32>
      %c0_32 = arith.constant 0 : index
      %c0_33 = arith.constant 0 : index
      %47 = vector.load %arg5[%c0_32, %c0_33] : memref<8x1xi32, #tpu.memory_space<vmem>>, vector<8x1xi32>
      %c0_i32_34 = arith.constant 0 : i32
      %48 = vector.broadcast %c0_i32_34 : i32 to vector<8x1xi32>
      %49 = arith.cmpi ne, %47, %48 : vector<8x1xi32>
      %50 = arith.extui %49 : vector<8x1xi1> to vector<8x1xi32>
      %51 = arith.sitofp %50 : vector<8x1xi32> to vector<8x1xf32>
      %c0_35 = arith.constant 0 : index
      %c0_36 = arith.constant 0 : index
      %52 = vector.load %arg10[%c0_35, %c0_36] : memref<8x1xf32, #tpu.memory_space<vmem>>, vector<8x1xf32>
      %53 = arith.subf %46, %52 : vector<8x1xf32>
      %54 = arith.mulf %53, %51 : vector<8x1xf32>
      %c0_37 = arith.constant 0 : index
      %c0_38 = arith.constant 0 : index
      %55 = vector.load %arg6[%c0_37, %c0_38] : memref<8x1xf32, #tpu.memory_space<vmem>>, vector<8x1xf32>
      tpu.vector_store %arg6[%c0_37, %c0_38], %54 {strides = array<i32>} : memref<8x1xf32, #tpu.memory_space<vmem>>, vector<8x1xf32>,
      %c0_39 = arith.constant 0 : index
      %c0_40 = arith.constant 0 : index
      %56 = vector.load %arg7[%c0_39, %c0_40] : memref<8x1xf32, #tpu.memory_space<vmem>>, vector<8x1xf32>
      tpu.vector_store %arg7[%c0_39, %c0_40], %51 {strides = array<i32>} : memref<8x1xf32, #tpu.memory_space<vmem>>, vector<8x1xf32>,
    } else {
    }
    return
  }
  func.func @transform_0(%arg0: i32, %arg1: i32) -> (i32, i32) {
    %c0_i32 = arith.constant 0 : i32
    %c0_i32_0 = arith.constant 0 : i32
    return %arg0, %c0_i32 : i32, i32
  }
  func.func @transform_1(%arg0: i32, %arg1: i32) -> (i32, i32) {
    %c0_i32 = arith.constant 0 : i32
    %c0_i32_0 = arith.constant 0 : i32
    return %c0_i32, %arg1 : i32, i32
  }
  func.func @transform_2(%arg0: i32, %arg1: i32) -> (i32, i32) {
    %c0_i32 = arith.constant 0 : i32
    %c0_i32_0 = arith.constant 0 : i32
    return %c0_i32, %arg1 : i32, i32
  }
  func.func @transform_3(%arg0: i32, %arg1: i32) -> (i32, i32) {
    %c0_i32 = arith.constant 0 : i32
    %c0_i32_0 = arith.constant 0 : i32
    return %arg0, %c0_i32 : i32, i32
  }
  func.func @transform_4(%arg0: i32, %arg1: i32) -> (i32, i32) {
    %c0_i32 = arith.constant 0 : i32
    %c0_i32_0 = arith.constant 0 : i32
    return %arg0, %c0_i32 : i32, i32
  }
  func.func @transform_5(%arg0: i32, %arg1: i32) -> (i32, i32) {
    %c0_i32 = arith.constant 0 : i32
    %c0_i32_0 = arith.constant 0 : i32
    return %arg0, %c0_i32 : i32, i32
  }
}

</mosaic_0001>

<llo_original>
// kernel: bert_loss.1
$region0: #{bert_loss.1}
  #allocation0 [shape = 'u32[]', space=smem, size = 0x4, offset = 0x4, fixed_abs, tag = 'smem constant byte address 0x4 - core index']
  #allocation1 [shape = 'u32[144,128]{1,0:T(1,128)}', space=vmem, size = 0x12000, scoped, tag = 'internal scratch']
  #allocation2 [shape = 'f32[8,1]{1,0:T(8,128)}', space=vmem, size = 0x1000, scoped, tag = 'scratch operand']
  #allocation3 [shape = 'f32[8,1]{1,0:T(8,128)}', space=vmem, size = 0x1000, scoped, tag = 'scratch operand']
  #allocation4 [shape = 'f32[8,1]{1,0:T(8,128)}', space=vmem, size = 0x1000, scoped, tag = 'scratch operand']
  %s0 = inlined_call_operand.vmem [shape: bf16[8,128], index: 0, kind: input, shape index: {}]
  %s1 = inlined_call_operand.vmem [shape: bf16[128,128], index: 1, kind: input, shape index: {}]
  %s2 = inlined_call_operand.vmem [shape: f32[1,128], index: 2, kind: input, shape index: {}]
  %s3 = inlined_call_operand.vmem [shape: s32[8,1], index: 3, kind: input, shape index: {}]
  %s4 = inlined_call_operand.vmem [shape: f32[8,1], index: 4, kind: output, shape index: {0}]
  %s5 = inlined_call_operand.vmem [shape: f32[8,1], index: 5, kind: output, shape index: {1}]
  %6 = xla_tuple %s4, %s5
  %s7 = sld [smem:[#allocation0]]
  $region42: #{bert_loss.1} parent=0
    _
  %s9 = ssub.s32 1, %s7
  %s10 = scalar_select 0, %s9, %s7
  // Predicated region
  $region2: #{bert_loss.1} parent=0 // pred_check
    _
  $region3: #{bert_loss.1} parent=0 // pred_check_branch
    %12 = sbr.rel (0) target = $region5
  $region4: #{bert_loss.1} parent=0 // pred_region
    _
  $region5: #{bert_loss.1} parent=0 // pred_fallthru
    _
  // Predicated region
  $region6: #{bert_loss.1} parent=0 // pred_check
    _
  $region7: #{bert_loss.1} parent=0 // pred_check_branch
    %14 = sbr.rel (0) target = $region9
  $region8: #{bert_loss.1} parent=0 // pred_region
    _
  $region9: #{bert_loss.1} parent=0 // pred_fallthru
    _
  // Predicated region
  $region10: #{bert_loss.1} parent=0 // pred_check
    _
  $region11: #{bert_loss.1} parent=0 // pred_check_branch
    %16 = sbr.rel (0) target = $region13
  $region12: #{bert_loss.1} parent=0 // pred_region
    _
  $region13: #{bert_loss.1} parent=0 // pred_fallthru
    _
  // Predicated region
  $region14: #{bert_loss.1} parent=0 // pred_check
    _
  $region15: #{bert_loss.1} parent=0 // pred_check_branch
    %18 = sbr.rel (0) target = $region17
  $region16: #{bert_loss.1} parent=0 // pred_region
    _
  $region17: #{bert_loss.1} parent=0 // pred_fallthru
    _
  %p20 = scmp.eq.s32.totalorder 0, 0
  // Predicated region
  $region18: #{bert_loss.1} parent=0 // pred_check
    %p21 = pneg %p20
  $region19: #{bert_loss.1} parent=0 // pred_check_branch
    %23 = sbr.rel (%p21) target = $region21
  $region20: #{bert_loss.1} parent=0 // pred_region
    %vm24 = vcmask 7168
    %25 = vst.msk [vmem:[#allocation2] sm:$0xff] %vm24, -inf
    %26 = vst.msk [vmem:[#allocation3] sm:$0xff] %vm24, 0.0
    %27 = vst.msk [vmem:[#allocation4] sm:$0xff] %vm24, 0.0
  $region21: #{bert_loss.1} parent=0 // pred_fallthru
    _
  %v28 = vld [vmem:[%s0] sm:$0xf]
  %v29 = vld [vmem:[%s1] sm:$0xf]
  %v30 = vld [vmem:[%s1 + $0x4] sm:$0xf]
  %v31 = vld [vmem:[%s1 + $0x8] sm:$0xf]
  %v32 = vld [vmem:[%s1 + $0xc] sm:$0xf]
  %v33 = vld [vmem:[%s1 + $0x10] sm:$0xf]
  %v34 = vld [vmem:[%s1 + $0x14] sm:$0xf]
  %v35 = vld [vmem:[%s1 + $0x18] sm:$0xf]
  %v36 = vld [vmem:[%s1 + $0x1c] sm:$0xf]
  %v37 = vld [vmem:[%s1 + $0x20] sm:$0xf]
  %v38 = vld [vmem:[%s1 + $0x24] sm:$0xf]
  %v39 = vld [vmem:[%s1 + $0x28] sm:$0xf]
  %v40 = vld [vmem:[%s1 + $0x2c] sm:$0xf]
  %v41 = vld [vmem:[%s1 + $0x30] sm:$0xf]
  %v42 = vld [vmem:[%s1 + $0x34] sm:$0xf]
  %v43 = vld [vmem:[%s1 + $0x38] sm:$0xf]
  %v44 = vld [vmem:[%s1 + $0x3c] sm:$0xf]
  %v45 = vld [vmem:[%s2] sm:$0x1]
  %v47 = vlaneseq
  %v48 = vshrl.u32 %v47, 7
  %v49 = vsub.s32 0, %v48
  %v50 = vrot.slane %v45, %v49
  %v68 = vunpack.c.l.b16 %v29
  %v69 = vunpack.c.l.b16 %v30
  %v70 = vunpack.c.l.b16 %v31
  %v71 = vunpack.c.l.b16 %v32
  %v72 = vunpack.c.l.b16 %v33
  %v73 = vunpack.c.l.b16 %v34
  %v74 = vunpack.c.l.b16 %v35
  %v75 = vunpack.c.l.b16 %v36
  %v76 = vunpack.c.l.b16 %v37
  %v77 = vunpack.c.l.b16 %v38
  %v78 = vunpack.c.l.b16 %v39
  %v79 = vunpack.c.l.b16 %v40
  %v80 = vunpack.c.l.b16 %v41
  %v81 = vunpack.c.l.b16 %v42
  %v82 = vunpack.c.l.b16 %v43
  %v83 = vunpack.c.l.b16 %v44
  %v84 = vpack.c.b16 %v69, %v68
  %v85 = vpack.c.b16 %v71, %v70
  %v86 = vpack.c.b16 %v73, %v72
  %v87 = vpack.c.b16 %v75, %v74
  %v88 = vpack.c.b16 %v77, %v76
  %v89 = vpack.c.b16 %v79, %v78
  %v90 = vpack.c.b16 %v81, %v80
  %v91 = vpack.c.b16 %v83, %v82
  %100 = vmatprep.subr.bf16.mxu0 0
  %101 = vmatpush1.bf16.msra.mxu0 %v91
  %102 = vmatprep.subr.bf16.mxu0 0
  %103 = vmatpush1.bf16.msra.mxu0 %v90
  %104 = vmatprep.subr.bf16.mxu0 0
  %105 = vmatpush1.bf16.msra.mxu0 %v89
  %106 = vmatprep.subr.bf16.mxu0 0
  %107 = vmatpush1.bf16.msra.mxu0 %v88
  %108 = vmatprep.subr.bf16.mxu0 0
  %109 = vmatpush1.bf16.msra.mxu0 %v87
  %110 = vmatprep.subr.bf16.mxu0 0
  %111 = vmatpush1.bf16.msra.mxu0 %v86
  %112 = vmatprep.subr.bf16.mxu0 0
  %113 = vmatpush1.bf16.msra.mxu0 %v85
  %114 = vmatprep.subr.bf16.mxu0 0
  %115 = vmatpush1.bf16.msra.mxu0 %v84
  %116 = vmatprep.subr.bf16.mxu0 0
  %117 = vmatpush2.bf16.msra.mxu0 0
  %118 = vmatprep.subr.bf16.mxu0 0
  %119 = vmatpush2.bf16.msra.mxu0 0
  %120 = vmatprep.subr.bf16.mxu0 0
  %121 = vmatpush2.bf16.msra.mxu0 0
  %122 = vmatprep.subr.bf16.mxu0 0
  %123 = vmatpush2.bf16.msra.mxu0 0
  %124 = vmatprep.subr.bf16.mxu0 0
  %125 = vmatpush2.bf16.msra.mxu0 0
  %126 = vmatprep.subr.bf16.mxu0 0
  %127 = vmatpush2.bf16.msra.mxu0 0
  %128 = vmatprep.subr.bf16.mxu0 0
  %129 = vmatpush2.bf16.msra.mxu0 0
  %130 = vmatprep.subr.bf16.mxu0 0
  %131 = vmatpush2.bf16.msra.mxu0 0
  %132 = vmatprep.mubr.bf16.mxu0 0
  %133 = vmatmul.mubr.bf16.gmra.mxu0 %v28
  %v134 = vpop.f32.mrf.mxu0
  %v135 = vadd.f32 %v50, %v134
  %v136 = vpop.f32.mrf.mxu0
  %v137 = vpop.f32.mrf.mxu0
  %v138 = vpop.f32.mrf.mxu0
  %139 = vdwg.mxu0
  %v140 = vld [vmem:[#allocation2] sm:$0xff]
  %141 = vmax.xlane.f32.xlu0 %v135
  %v142 = vpop.xlane.xlu0 %141
  %v143 = vmax.f32 %v140, %v142
  %v144 = vsub.f32 %v140, %v143
  %v145 = vmul.f32 %v144, 1.442695
  %v146 = vpow.pop %v145
  %v147 = vld [vmem:[#allocation3] sm:$0xff]
  %v148 = vmul.f32 %v146, %v147
  %150 = vset.pattern.permute.xlu0 0
  %151 = vperm.xlu0 %150, %v143
  %v152 = vpop.permute.xlu0 %151
  %v154 = vsub.f32 %v135, %v152
  %v155 = vmul.f32 %v154, 1.442695
  %v156 = vpow.pop %v155
  %157 = vadd.xlane.f32.xlu0 %v156
  %v158 = vpop.xlane.xlu0 %157
  %v159 = vadd.f32 %v148, %v158
  %vm160 = vcmask 7168
  %161 = vst.msk [vmem:[#allocation3] sm:$0xff] %vm160, %v159
  %162 = vst.msk [vmem:[#allocation2] sm:$0xff] %vm160, %v143
  %v163 = vld [vmem:[%s3] sm:$0xff]
  %s164 = smul.u32 0, 128
  %v165 = vstv %s164
  %v166 = vsub.s32 %v163, %v165
  %v167 = vlaneseq
  %v168 = vand.u32 %v167, 127
  %v169 = vld [vmem:[#allocation4] sm:$0xff]
  %170 = vset.pattern.permute.xlu0 0
  %171 = vperm.xlu0 %170, %v166
  %v172 = vpop.permute.xlu0 %171
  %vm173 = vcmp.eq.s32.totalorder %v168, %v172
  %v174 = vsel %vm173, %v135, 0.0
  %175 = vadd.xlane.f32.xlu0 %v174
  %v176 = vpop.xlane.xlu0 %175
  %v177 = vadd.f32 %v169, %v176
  %178 = vst.msk [vmem:[#allocation4] sm:$0xff] %vm160, %v177
  // Predicated region
  $region22: #{bert_loss.1} parent=0 // pred_check
    %p179 = pneg %p20
  $region23: #{bert_loss.1} parent=0 // pred_check_branch
    %181 = sbr.rel (%p179) target = $region25
  $region24: #{bert_loss.1} parent=0 // pred_region
    %v182 = vld [vmem:[#allocation2] sm:$0xff]
    %v183 = vld [vmem:[#allocation3] sm:$0xff]
    %v184 = vlog2.pop %v183
    %v185 = vmul.f32 %v184, 0.6931472
    %v186 = vadd.f32 %v182, %v185
    %v187 = vld [vmem:[%s3] sm:$0xff]
    %vm188 = vcmp.ne.s32.totalorder %v187, 0
    %v189 = vsel %vm188, 1, 0
    %v190 = vcvt.s32.f32 %v189
    %v191 = vld [vmem:[#allocation4] sm:$0xff]
    %v192 = vsub.f32 %v186, %v191
    %v193 = vmul.f32 %v192, %v190
    %194 = vst.msk [vmem:[%s4] sm:$0xff] %vm160, %v193
    %195 = vst.msk [vmem:[%s5] sm:$0xff] %vm160, %v190
  $region25: #{bert_loss.1} parent=0 // pred_fallthru
    _
  // Predicated region
  $region26: #{bert_loss.1} parent=0 // pred_check
    _
  $region27: #{bert_loss.1} parent=0 // pred_check_branch
    %197 = sbr.rel (0) target = $region29
  $region28: #{bert_loss.1} parent=0 // pred_region
    _
  $region29: #{bert_loss.1} parent=0 // pred_fallthru
    _
  // Predicated region
  $region30: #{bert_loss.1} parent=0 // pred_check
    _
  $region31: #{bert_loss.1} parent=0 // pred_check_branch
    %199 = sbr.rel (0) target = $region33
  $region32: #{bert_loss.1} parent=0 // pred_region
    _
  $region33: #{bert_loss.1} parent=0 // pred_fallthru
    _
  // Predicated region
  $region34: #{bert_loss.1} parent=0 // pred_check
    _
  $region35: #{bert_loss.1} parent=0 // pred_check_branch
    %201 = sbr.rel (0) target = $region37
  $region36: #{bert_loss.1} parent=0 // pred_region
    _
  $region37: #{bert_loss.1} parent=0 // pred_fallthru
    _
  // Predicated region
  $region38: #{bert_loss.1} parent=0 // pred_check
    _
  $region39: #{bert_loss.1} parent=0 // pred_check_branch
    %203 = sbr.rel (0) target = $region41
  $region40: #{bert_loss.1} parent=0 // pred_region
    _
  $region41: #{bert_loss.1} parent=0 // pred_fallthru
    _

</llo_original>
